<compile_context>
chip_gen: v5e
topology: v5e:2x2
jax: 0.10.0
libtpu: 0.0.40
codegen_flags: <defaults>
</compile_context>

<pallas_src>
import jax
import jax.numpy as jnp
from jax.experimental import pallas as pl
from jax.experimental.pallas import tpu as pltpu

H_TEXT = 32                      # lm.config.hidden_size (small synthetic value)
H_GATE = 64                      # gate hidden dim (nn.Linear(hidden, 64))
N_EXPERT = 3                     # gate output dim
H_THREAT = 64                    # threat encoder output dim
H_LAW = 32                       # law encoder output dim
H_FUSED = H_TEXT + H_THREAT + H_LAW   # 128 -> exactly one lane group
N_CLS = 2                        # decision head output dim
SEQ = 8                          # synthetic LM sequence length (CLS glue only)

BATCH_TILE_MAX = 1024            # rows per grid step (mult of 8, VMEM-safe on v7x)
NEG_BIG = -1e30                  # softmax padding logit -> exp underflows to 0


def _round_up(x, m):
    return (x + m - 1) // m * m


def moe_kernel(feat_ref, w_ref, b_ref, out_ref):
    F = H_FUSED
    feat = feat_ref[...]                                        # (TILE, 128)

    # Resident packed weight slab: rows [0:128)=W1p, [128:256)=W2p,
    # [256:384)=selector, [384:512)=Wdp.  Static, 128-row-aligned slices.
    w1 = w_ref[0 * F:1 * F, :]
    w2 = w_ref[1 * F:2 * F, :]
    sel = w_ref[2 * F:3 * F, :]
    wd = w_ref[3 * F:4 * F, :]
    b1 = b_ref[0:1, :]
    b2 = b_ref[1:2, :]
    bd = b_ref[2:3, :]

    # ---- gate network: Linear(H,64) -> Tanh -> Linear(64,3), padded to 128
    h = jnp.tanh(jnp.dot(feat, w1, preferred_element_type=jnp.float32) + b1)
    logits = jnp.dot(h, w2, preferred_element_type=jnp.float32) + b2

    # ---- stable softmax; padded lanes carry -1e30 bias -> exp() == 0 exactly
    logits = logits - jnp.max(logits, axis=-1, keepdims=True)
    e = jnp.exp(logits)
    gate = e * pl.reciprocal(jnp.sum(e, axis=-1, keepdims=True), approx=True)

    # ---- broadcast the 3 gate values onto their lane bands via a selector
    #      matmul (MXU) instead of cross-lane broadcasts (XLU)
    gate_b = jnp.dot(gate, sel, preferred_element_type=jnp.float32)
    fused = gate_b * feat                                       # (TILE, 128)

    # ---- decision head: K=128 single matmul, lane-dense (padded) output store
    out_ref[...] = jnp.dot(fused, wd, preferred_element_type=jnp.float32) + bd


def _pack_params(params):
    """Zero-pad all Linear weights/biases to lane-dense 128-wide shapes, build
    the (128,128) gate->lane-band selector, and pack everything into one
    (512,128) weight slab + one (8,128) bias tile (3 DMA streams total)."""
    w1, b1, w2, b2, wd, bd = params
    F = H_FUSED
    w1p = jnp.zeros((F, F), jnp.float32).at[:H_TEXT, :H_GATE].set(w1)
    w2p = jnp.zeros((F, F), jnp.float32).at[:H_GATE, :N_EXPERT].set(w2)
    wdp = jnp.zeros((F, F), jnp.float32).at[:, :N_CLS].set(wd)
    sel = jnp.zeros((F, F), jnp.float32)
    sel = sel.at[0, 0:H_TEXT].set(1.0)
    sel = sel.at[1, H_TEXT:H_TEXT + H_THREAT].set(1.0)
    sel = sel.at[2, H_TEXT + H_THREAT:H_FUSED].set(1.0)
    w_all = jnp.concatenate([w1p, w2p, sel, wdp], axis=0)       # (512, 128)

    b_all = jnp.zeros((8, F), jnp.float32)
    b_all = b_all.at[0, :H_GATE].set(b1.reshape(-1))
    b_all = b_all.at[1, :].set(NEG_BIG)
    b_all = b_all.at[1, :N_EXPERT].set(b2.reshape(-1))
    b_all = b_all.at[2, :N_CLS].set(bd.reshape(-1))
    return w_all, b_all


def safety_aware_moe(text_hidden, threat_features, law_features, params):
    """text_hidden: (B, SEQ, H_TEXT) last hidden states of the LM."""
    # Glue in plain JAX: CLS extraction + feature pre-concat -> one lane-dense
    # (B, 128) activation (single DMA stream, no in-kernel concat).
    text_features = text_hidden[:, 0, :]
    features = jnp.concatenate(
        [text_features, threat_features, law_features], axis=-1
    ).astype(jnp.float32)                                       # (B, 128)

    B = features.shape[0]
    tile = min(BATCH_TILE_MAX, _round_up(B, 8))
    padded_B = _round_up(B, tile)
    if padded_B != B:
        features = jnp.pad(features, ((0, padded_B - B), (0, 0)))
    grid = (padded_B // tile,)

    w_all, b_all = _pack_params(params)

    act_spec = pl.BlockSpec((tile, H_FUSED), lambda i: (i, 0))
    w_spec = pl.BlockSpec((4 * H_FUSED, H_FUSED), lambda i: (0, 0))  # resident
    b_spec = pl.BlockSpec((8, H_FUSED), lambda i: (0, 0))            # resident

    out_padded = pl.pallas_call(
        moe_kernel,
        out_shape=jax.ShapeDtypeStruct((padded_B, H_FUSED), jnp.float32),
        grid_spec=pltpu.PrefetchScalarGridSpec(
            num_scalar_prefetch=0,
            grid=grid,
            in_specs=[act_spec, w_spec, b_spec],
            out_specs=act_spec,
        ),
        compiler_params=pltpu.CompilerParams(
            dimension_semantics=("parallel",),
        ),
    )(features, w_all, b_all)

    return out_padded[:B, :N_CLS]


def make_params(key):
    ks = jax.random.split(key, 6)
    scale = 0.05
    w1 = scale * jax.random.normal(ks[0], (H_TEXT, H_GATE), jnp.float32)
    b1 = scale * jax.random.normal(ks[1], (1, H_GATE), jnp.float32)
    w2 = scale * jax.random.normal(ks[2], (H_GATE, N_EXPERT), jnp.float32)
    b2 = scale * jax.random.normal(ks[3], (1, N_EXPERT), jnp.float32)
    wd = scale * jax.random.normal(ks[4], (H_FUSED, N_CLS), jnp.float32)
    bd = scale * jax.random.normal(ks[5], (1, N_CLS), jnp.float32)
    return w1, b1, w2, b2, wd, bd


def reference(text_hidden, threat_features, law_features, params):
    w1, b1, w2, b2, wd, bd = params
    text = text_hidden[:, 0, :]
    h = jnp.tanh(text @ w1 + b1)
    gate = jax.nn.softmax(h @ w2 + b2, axis=-1)
    fused = jnp.concatenate(
        [gate[:, 0:1] * text,
         gate[:, 1:2] * threat_features,
         gate[:, 2:3] * law_features],
        axis=-1,
    )
    return fused @ wd + bd


if __name__ == "__main__":
    B = 2
    key = jax.random.PRNGKey(0)
    k_in, k_p = jax.random.split(key)
    k_text, k_threat, k_law = jax.random.split(k_in, 3)

    text_hidden = jax.random.normal(k_text, (B, SEQ, H_TEXT), jnp.float32)
    threat_features = jax.random.normal(k_threat, (B, H_THREAT), jnp.float32)
    law_features = jax.random.normal(k_law, (B, H_LAW), jnp.float32)
    params = make_params(k_p)

    logits = safety_aware_moe(text_hidden, threat_features, law_features, params)
    logits = jax.block_until_ready(logits)

    ref = reference(text_hidden, threat_features, law_features, params)
    assert logits.shape == (B, N_CLS), logits.shape
    # approx reciprocal in the softmax -> slightly looser tolerance than 1e-5
    assert jnp.allclose(logits, ref, atol=2e-3, rtol=2e-3), (logits, ref)

    print("KERNEL_OK")
</pallas_src>

<mosaic_0001>
module attributes {stable_mosaic.version = 11 : i64} {
  func.func @moe_kernel(%arg0: i32, %arg1: memref<8x128xf32, #tpu.memory_space<vmem>>, %arg2: memref<512x128xf32, #tpu.memory_space<vmem>>, %arg3: memref<8x128xf32, #tpu.memory_space<vmem>>, %arg4: memref<8x128xf32, #tpu.memory_space<vmem>>) attributes {dimension_semantics = [#tpu.dimension_semantics<parallel>], iteration_bounds = array<i64: 1>, scalar_prefetch = 0 : i64, scratch_operands = 0 : i64, tpu.core_type = #tpu.core_type<tc>, window_params = [{transform_indices = @transform_0, window_bounds = array<i64: 8, 128>}, {pipeline_mode = #tpu.pipeline_mode<synchronous>, transform_indices = @transform_1, window_bounds = array<i64: 512, 128>}, {pipeline_mode = #tpu.pipeline_mode<synchronous>, transform_indices = @transform_2, window_bounds = array<i64: 8, 128>}, {transform_indices = @transform_3, window_bounds = array<i64: 8, 128>}]} {
    %c0 = arith.constant 0 : index
    %c0_0 = arith.constant 0 : index
    %0 = vector.load %arg1[%c0, %c0_0] : memref<8x128xf32, #tpu.memory_space<vmem>>, vector<8x128xf32>
    %c0_1 = arith.constant 0 : index
    %c0_2 = arith.constant 0 : index
    %1 = vector.load %arg2[%c0_1, %c0_2] : memref<512x128xf32, #tpu.memory_space<vmem>>, vector<128x128xf32>
    %c128 = arith.constant 128 : index
    %c0_3 = arith.constant 0 : index
    %2 = vector.load %arg2[%c128, %c0_3] : memref<512x128xf32, #tpu.memory_space<vmem>>, vector<128x128xf32>
    %c256 = arith.constant 256 : index
    %c0_4 = arith.constant 0 : index
    %3 = vector.load %arg2[%c256, %c0_4] : memref<512x128xf32, #tpu.memory_space<vmem>>, vector<128x128xf32>
    %c384 = arith.constant 384 : index
    %c0_5 = arith.constant 0 : index
    %4 = vector.load %arg2[%c384, %c0_5] : memref<512x128xf32, #tpu.memory_space<vmem>>, vector<128x128xf32>
    %c0_6 = arith.constant 0 : index
    %c0_7 = arith.constant 0 : index
    %5 = vector.load %arg3[%c0_6, %c0_7] : memref<8x128xf32, #tpu.memory_space<vmem>>, vector<1x128xf32>
    %c1 = arith.constant 1 : index
    %c0_8 = arith.constant 0 : index
    %6 = vector.load %arg3[%c1, %c0_8] : memref<8x128xf32, #tpu.memory_space<vmem>>, vector<1x128xf32>
    %c2 = arith.constant 2 : index
    %c0_9 = arith.constant 0 : index
    %7 = vector.load %arg3[%c2, %c0_9] : memref<8x128xf32, #tpu.memory_space<vmem>>, vector<1x128xf32>
    %cst = arith.constant dense<0.000000e+00> : vector<8x128xf32>
    %8 = tpu.matmul %0, %1, %cst {dimension_numbers = #tpu.dot_dimension_numbers<[1], [0], [0], [1], [0, 0, 1, 1], [], []>} : vector<8x128xf32>, vector<128x128xf32>, vector<8x128xf32> -> vector<8x128xf32>
    %9 = vector.broadcast %5 : vector<1x128xf32> to vector<8x128xf32>
    %10 = arith.addf %8, %9 : vector<8x128xf32>
    %11 = math.tanh %10 : vector<8x128xf32>
    %cst_10 = arith.constant dense<0.000000e+00> : vector<8x128xf32>
    %12 = tpu.matmul %11, %2, %cst_10 {dimension_numbers = #tpu.dot_dimension_numbers<[1], [0], [0], [1], [0, 0, 1, 1], [], []>} : vector<8x128xf32>, vector<128x128xf32>, vector<8x128xf32> -> vector<8x128xf32>
    %13 = vector.broadcast %6 : vector<1x128xf32> to vector<8x128xf32>
    %14 = arith.addf %12, %13 : vector<8x128xf32>
    %cst_11 = arith.constant dense<0xFF800000> : vector<8xf32>
    %15 = vector.multi_reduction <maximumf>, %14, %cst_11 [1] : vector<8x128xf32> to vector<8xf32>
    %16 = vector.shape_cast %15 : vector<8xf32> to vector<8x1xf32>
    %17 = vector.broadcast %16 : vector<8x1xf32> to vector<8x128xf32>
    %18 = arith.subf %14, %17 : vector<8x128xf32>
    %19 = math.exp %18 : vector<8x128xf32>
    %cst_12 = arith.constant dense<0.000000e+00> : vector<8xf32>
    %20 = vector.multi_reduction <add>, %19, %cst_12 [1] : vector<8x128xf32> to vector<8xf32>
    %21 = vector.shape_cast %20 : vector<8xf32> to vector<8x1xf32>
    %22 = tpu.reciprocal %21 {approx = true} : vector<8x1xf32> -> vector<8x1xf32>
    %23 = vector.broadcast %22 : vector<8x1xf32> to vector<8x128xf32>
    %24 = arith.mulf %19, %23 : vector<8x128xf32>
    %cst_13 = arith.constant dense<0.000000e+00> : vector<8x128xf32>
    %25 = tpu.matmul %24, %3, %cst_13 {dimension_numbers = #tpu.dot_dimension_numbers<[1], [0], [0], [1], [0, 0, 1, 1], [], []>} : vector<8x128xf32>, vector<128x128xf32>, vector<8x128xf32> -> vector<8x128xf32>
    %26 = arith.mulf %25, %0 : vector<8x128xf32>
    %cst_14 = arith.constant dense<0.000000e+00> : vector<8x128xf32>
    %27 = tpu.matmul %26, %4, %cst_14 {dimension_numbers = #tpu.dot_dimension_numbers<[1], [0], [0], [1], [0, 0, 1, 1], [], []>} : vector<8x128xf32>, vector<128x128xf32>, vector<8x128xf32> -> vector<8x128xf32>
    %28 = vector.broadcast %7 : vector<1x128xf32> to vector<8x128xf32>
    %29 = arith.addf %27, %28 : vector<8x128xf32>
    %c0_15 = arith.constant 0 : index
    %c0_16 = arith.constant 0 : index
    %30 = vector.load %arg4[%c0_15, %c0_16] : memref<8x128xf32, #tpu.memory_space<vmem>>, vector<8x128xf32>
    tpu.vector_store %arg4[%c0_15, %c0_16], %29 {strides = array<i32>} : memref<8x128xf32, #tpu.memory_space<vmem>>, vector<8x128xf32>,
    return
  }
  func.func @transform_0(%arg0: i32) -> (i32, i32) {
    %c0_i32 = arith.constant 0 : i32
    %c0_i32_0 = arith.constant 0 : i32
    return %arg0, %c0_i32 : i32, i32
  }
  func.func @transform_1(%arg0: i32) -> (i32, i32) {
    %c0_i32 = arith.constant 0 : i32
    %c0_i32_0 = arith.constant 0 : i32
    %c0_i32_1 = arith.constant 0 : i32
    return %c0_i32, %c0_i32_0 : i32, i32
  }
  func.func @transform_2(%arg0: i32) -> (i32, i32) {
    %c0_i32 = arith.constant 0 : i32
    %c0_i32_0 = arith.constant 0 : i32
    %c0_i32_1 = arith.constant 0 : i32
    return %c0_i32, %c0_i32_0 : i32, i32
  }
  func.func @transform_3(%arg0: i32) -> (i32, i32) {
    %c0_i32 = arith.constant 0 : i32
    %c0_i32_0 = arith.constant 0 : i32
    return %arg0, %c0_i32 : i32, i32
  }
}

</mosaic_0001>

<llo_original>
// kernel: tpu_custom_call.1
$region0: #{tpu_custom_call.1}
  #allocation0 [shape = 'u32[]', space=smem, size = 0x4, offset = 0x4, fixed_abs, tag = 'smem constant byte address 0x4 - core index']
  #allocation1 [shape = 'u32[72,128]{1,0:T(1,128)}', space=vmem, size = 0x9000, scoped, tag = 'internal scratch']
  %s0 = inlined_call_operand.hbm [shape: f32[8,128], index: 0, kind: input, shape index: {}]
  %s1 = inlined_call_operand.hbm [shape: f32[512,128], index: 1, kind: input, shape index: {}]
  %s2 = inlined_call_operand.hbm [shape: f32[8,128], index: 2, kind: input, shape index: {}]
  %s3 = inlined_call_operand.hbm [shape: f32[8,128], index: 3, kind: output, shape index: {}]
  %s4 = sld [smem:[#allocation0]]
  $region34: #{tpu_custom_call.1} parent=0
    _
  %s6 = ssub.s32 1, %s4
  %s7 = scalar_select 0, %s6, %s4
  $region1: #{tpu_custom_call.1} parent=0
    #allocation2 [shape = 'u8[4096]{0}', space=vmem, size = 0x1000, scoped, tag = 'input window, operand 0, single buffered']
    #allocation3 [shape = 's32[1]{0}', space=sflag, size = 0x4, scoped, tag = 'scoped memory for tpu_custom_call.1']
    #allocation4 [shape = 's32[1]{0}', space=sflag, size = 0x4, scoped, tag = 'scoped memory for tpu_custom_call.1']
    #allocation5 [shape = 'u8[262144]{0}', space=vmem, size = 0x40000, scoped, tag = 'input window, operand 1, single buffered']
    #allocation6 [shape = 's32[1]{0}', space=sflag, size = 0x4, scoped, tag = 'scoped memory for tpu_custom_call.1']
    #allocation7 [shape = 'u8[4096]{0}', space=vmem, size = 0x1000, scoped, tag = 'input window, operand 2, single buffered']
    #allocation8 [shape = 'u8[4096]{0}', space=vmem, size = 0x1000, scoped, tag = 'output window, operand 0, single buffered']
    %8 = vsyncpa [#allocation3], 0
    %9 = vsyncpa [#allocation6], 0
    %10 = vsyncpa [#allocation4], 0
    // Predicated region
    $region2: #{tpu_custom_call.1} parent=1 // pred_check
      _
    $region3: #{tpu_custom_call.1} parent=1 // pred_check_branch
      %12 = sbr.rel (0) target = $region5
    $region4: #{tpu_custom_call.1} parent=1 // pred_region
      %14 = vsyncadd [#allocation3], 0
      %s16 = sshll.u32 %s0, 4
      %s17 = int_to_ptr.hbm [resolvable:$true] %s16
      %s18 = sshll.u32 [#allocation2], 4
      %s19 = int_to_ptr.vmem [resolvable:$true] %s18
      %21 = dma.hbm_to_vmem [thread:$0]  %s17, 128, %s19, [#allocation3]
    $region5: #{tpu_custom_call.1} parent=1 // pred_fallthru
      _
    // Predicated region
    $region6: #{tpu_custom_call.1} parent=1 // pred_check
      _
    $region7: #{tpu_custom_call.1} parent=1 // pred_check_branch
      %23 = sbr.rel (0) target = $region9
    $region8: #{tpu_custom_call.1} parent=1 // pred_region
      %25 = vsyncadd [#allocation6], 0
      %s26 = sshll.u32 %s1, 4
      %s27 = int_to_ptr.hbm [resolvable:$true] %s26
      %s28 = sshll.u32 [#allocation5], 4
      %s29 = int_to_ptr.vmem [resolvable:$true] %s28
      %34 = dma.hbm_to_vmem [thread:$0]  %s27, 8192, %s29, [#allocation6], 128, 128, 8
    $region9: #{tpu_custom_call.1} parent=1 // pred_fallthru
      _
    // Predicated region
    $region10: #{tpu_custom_call.1} parent=1 // pred_check
      _
    $region11: #{tpu_custom_call.1} parent=1 // pred_check_branch
      %36 = sbr.rel (0) target = $region13
    $region12: #{tpu_custom_call.1} parent=1 // pred_region
      %38 = vsyncadd [#allocation6], 0
      %s40 = sshll.u32 %s2, 4
      %s41 = int_to_ptr.hbm [resolvable:$true] %s40
      %s42 = sshll.u32 [#allocation7], 4
      %s43 = int_to_ptr.vmem [resolvable:$true] %s42
      %45 = dma.hbm_to_vmem [thread:$0]  %s41, 128, %s43, [#allocation6]
    $region13: #{tpu_custom_call.1} parent=1 // pred_fallthru
      _
    // Predicated region
    $region14: #{tpu_custom_call.1} parent=1 // pred_check
      _
    $region15: #{tpu_custom_call.1} parent=1 // pred_check_branch
      %47 = sbr.rel (0) target = $region17
    $region16: #{tpu_custom_call.1} parent=1 // pred_region
      %49 = dma.done [#allocation3], 128
    $region17: #{tpu_custom_call.1} parent=1 // pred_fallthru
      _
    // Predicated region
    $region18: #{tpu_custom_call.1} parent=1 // pred_check
      _
    $region19: #{tpu_custom_call.1} parent=1 // pred_check_branch
      %51 = sbr.rel (0) target = $region21
    $region20: #{tpu_custom_call.1} parent=1 // pred_region
      %53 = dma.done [#allocation6], 8192
    $region21: #{tpu_custom_call.1} parent=1 // pred_fallthru
      _
    // Predicated region
    $region22: #{tpu_custom_call.1} parent=1 // pred_check
      _
    $region23: #{tpu_custom_call.1} parent=1 // pred_check_branch
      %55 = sbr.rel (0) target = $region25
    $region24: #{tpu_custom_call.1} parent=1 // pred_region
      %57 = dma.done [#allocation6], 128
    $region25: #{tpu_custom_call.1} parent=1 // pred_fallthru
      _
    %v58 = vld [vmem:[#allocation2] sm:$0xff]
    %v59 = vld [vmem:[#allocation5] sm:$0xff]
    %v60 = vld [vmem:[#allocation5 + $0x8] sm:$0xff]
    %v61 = vld [vmem:[#allocation5 + $0x10] sm:$0xff]
    %v62 = vld [vmem:[#allocation5 + $0x18] sm:$0xff]
    %v63 = vld [vmem:[#allocation5 + $0x20] sm:$0xff]
    %v64 = vld [vmem:[#allocation5 + $0x28] sm:$0xff]
    %v65 = vld [vmem:[#allocation5 + $0x30] sm:$0xff]
    %v66 = vld [vmem:[#allocation5 + $0x38] sm:$0xff]
    %v67 = vld [vmem:[#allocation5 + $0x40] sm:$0xff]
    %v68 = vld [vmem:[#allocation5 + $0x48] sm:$0xff]
    %v69 = vld [vmem:[#allocation5 + $0x50] sm:$0xff]
    %v70 = vld [vmem:[#allocation5 + $0x58] sm:$0xff]
    %v71 = vld [vmem:[#allocation5 + $0x60] sm:$0xff]
    %v72 = vld [vmem:[#allocation5 + $0x68] sm:$0xff]
    %v73 = vld [vmem:[#allocation5 + $0x70] sm:$0xff]
    %v74 = vld [vmem:[#allocation5 + $0x78] sm:$0xff]
    %v75 = vld [vmem:[#allocation5 + $0x80] sm:$0xff]
    %v76 = vld [vmem:[#allocation5 + $0x88] sm:$0xff]
    %v77 = vld [vmem:[#allocation5 + $0x90] sm:$0xff]
    %v78 = vld [vmem:[#allocation5 + $0x98] sm:$0xff]
    %v79 = vld [vmem:[#allocation5 + $0xa0] sm:$0xff]
    %v80 = vld [vmem:[#allocation5 + $0xa8] sm:$0xff]
    %v81 = vld [vmem:[#allocation5 + $0xb0] sm:$0xff]
    %v82 = vld [vmem:[#allocation5 + $0xb8] sm:$0xff]
    %v83 = vld [vmem:[#allocation5 + $0xc0] sm:$0xff]
    %v84 = vld [vmem:[#allocation5 + $0xc8] sm:$0xff]
    %v85 = vld [vmem:[#allocation5 + $0xd0] sm:$0xff]
    %v86 = vld [vmem:[#allocation5 + $0xd8] sm:$0xff]
    %v87 = vld [vmem:[#allocation5 + $0xe0] sm:$0xff]
    %v88 = vld [vmem:[#allocation5 + $0xe8] sm:$0xff]
    %v89 = vld [vmem:[#allocation5 + $0xf0] sm:$0xff]
    %v90 = vld [vmem:[#allocation5 + $0xf8] sm:$0xff]
    %v91 = vld [vmem:[#allocation5 + $0x100] sm:$0xff]
    %v92 = vld [vmem:[#allocation5 + $0x108] sm:$0xff]
    %v93 = vld [vmem:[#allocation5 + $0x110] sm:$0xff]
    %v94 = vld [vmem:[#allocation5 + $0x118] sm:$0xff]
    %v95 = vld [vmem:[#allocation5 + $0x120] sm:$0xff]
    %v96 = vld [vmem:[#allocation5 + $0x128] sm:$0xff]
    %v97 = vld [vmem:[#allocation5 + $0x130] sm:$0xff]
    %v98 = vld [vmem:[#allocation5 + $0x138] sm:$0xff]
    %v99 = vld [vmem:[#allocation5 + $0x140] sm:$0xff]
    %v100 = vld [vmem:[#allocation5 + $0x148] sm:$0xff]
    %v101 = vld [vmem:[#allocation5 + $0x150] sm:$0xff]
    %v102 = vld [vmem:[#allocation5 + $0x158] sm:$0xff]
    %v103 = vld [vmem:[#allocation5 + $0x160] sm:$0xff]
    %v104 = vld [vmem:[#allocation5 + $0x168] sm:$0xff]
    %v105 = vld [vmem:[#allocation5 + $0x170] sm:$0xff]
    %v106 = vld [vmem:[#allocation5 + $0x178] sm:$0xff]
    %v107 = vld [vmem:[#allocation5 + $0x180] sm:$0xff]
    %v108 = vld [vmem:[#allocation5 + $0x188] sm:$0xff]
    %v109 = vld [vmem:[#allocation5 + $0x190] sm:$0xff]
    %v110 = vld [vmem:[#allocation5 + $0x198] sm:$0xff]
    %v111 = vld [vmem:[#allocation5 + $0x1a0] sm:$0xff]
    %v112 = vld [vmem:[#allocation5 + $0x1a8] sm:$0xff]
    %v113 = vld [vmem:[#allocation5 + $0x1b0] sm:$0xff]
    %v114 = vld [vmem:[#allocation5 + $0x1b8] sm:$0xff]
    %v115 = vld [vmem:[#allocation5 + $0x1c0] sm:$0xff]
    %v116 = vld [vmem:[#allocation5 + $0x1c8] sm:$0xff]
    %v117 = vld [vmem:[#allocation5 + $0x1d0] sm:$0xff]
    %v118 = vld [vmem:[#allocation5 + $0x1d8] sm:$0xff]
    %v119 = vld [vmem:[#allocation5 + $0x1e0] sm:$0xff]
    %v120 = vld [vmem:[#allocation5 + $0x1e8] sm:$0xff]
    %v121 = vld [vmem:[#allocation5 + $0x1f0] sm:$0xff]
    %v122 = vld [vmem:[#allocation5 + $0x1f8] sm:$0xff]
    %v123 = vld [vmem:[#allocation7] sm:$0x1]
    %v124 = vld [vmem:[#allocation7 + $0x1] sm:$0x1]
    %v125 = vld [vmem:[#allocation7 + $0x2] sm:$0x1]
    %v126 = vperm.slane %v123, 0
    %127 = vmatpush.msra.mxu0 %v74
    %128 = vmatpush.msra.mxu0 %v73
    %129 = vmatpush.msra.mxu0 %v72
    %130 = vmatpush.msra.mxu0 %v71
    %131 = vmatpush.msra.mxu0 %v70
    %132 = vmatpush.msra.mxu0 %v69
    %133 = vmatpush.msra.mxu0 %v68
    %134 = vmatpush.msra.mxu0 %v67
    %135 = vmatpush.msra.mxu0 %v66
    %136 = vmatpush.msra.mxu0 %v65
    %137 = vmatpush.msra.mxu0 %v64
    %138 = vmatpush.msra.mxu0 %v63
    %139 = vmatpush.msra.mxu0 %v62
    %140 = vmatpush.msra.mxu0 %v61
    %141 = vmatpush.msra.mxu0 %v60
    %142 = vmatpush.msra.mxu0 %v59
    %143 = vmatmul.f32.gmra.mxu0 %v58
    %v144 = vpop.f32.mrf.mxu0
    %v145 = vadd.f32 %v126, %v144
    %146 = vdwg.mxu0
    %v147 = vtanh.pop %v145
    %v148 = vperm.slane %v124, 0
    %149 = vmatpush.msra.mxu0 %v90
    %150 = vmatpush.msra.mxu0 %v89
    %151 = vmatpush.msra.mxu0 %v88
    %152 = vmatpush.msra.mxu0 %v87
    %153 = vmatpush.msra.mxu0 %v86
    %154 = vmatpush.msra.mxu0 %v85
    %155 = vmatpush.msra.mxu0 %v84
    %156 = vmatpush.msra.mxu0 %v83
    %157 = vmatpush.msra.mxu0 %v82
    %158 = vmatpush.msra.mxu0 %v81
    %159 = vmatpush.msra.mxu0 %v80
    %160 = vmatpush.msra.mxu0 %v79
    %161 = vmatpush.msra.mxu0 %v78
    %162 = vmatpush.msra.mxu0 %v77
    %163 = vmatpush.msra.mxu0 %v76
    %164 = vmatpush.msra.mxu0 %v75
    %165 = vmatmul.f32.gmra.mxu0 %v147
    %v166 = vpop.f32.mrf.mxu0
    %v167 = vadd.f32 %v148, %v166
    %168 = vdwg.mxu0
    %169 = vmax.xlane.f32.xlu0 %v167
    %v170 = vpop.xlane.xlu0 %169
    %v171 = vsub.f32 %v167, %v170
    %v172 = vmul.f32 %v171, 1.442695
    %v173 = vpow.pop %v172
    %174 = vadd.xlane.f32.xlu0 %v173
    %v175 = vpop.xlane.xlu0 %174
    %v176 = vrcp.pop %v175
    %v177 = vmul.f32 %v173, %v176
    %178 = vmatpush.msra.mxu0 %v106
    %179 = vmatpush.msra.mxu0 %v105
    %180 = vmatpush.msra.mxu0 %v104
    %181 = vmatpush.msra.mxu0 %v103
    %182 = vmatpush.msra.mxu0 %v102
    %183 = vmatpush.msra.mxu0 %v101
    %184 = vmatpush.msra.mxu0 %v100
    %185 = vmatpush.msra.mxu0 %v99
    %186 = vmatpush.msra.mxu0 %v98
    %187 = vmatpush.msra.mxu0 %v97
    %188 = vmatpush.msra.mxu0 %v96
    %189 = vmatpush.msra.mxu0 %v95
    %190 = vmatpush.msra.mxu0 %v94
    %191 = vmatpush.msra.mxu0 %v93
    %192 = vmatpush.msra.mxu0 %v92
    %193 = vmatpush.msra.mxu0 %v91
    %194 = vmatmul.f32.gmra.mxu0 %v177
    %v195 = vpop.f32.mrf.mxu0
    %v196 = vadd.f32 0.0, %v195
    %197 = vdwg.mxu0
    %v198 = vmul.f32 %v196, %v58
    %v199 = vperm.slane %v125, 0
    %200 = vmatpush.msra.mxu0 %v122
    %201 = vmatpush.msra.mxu0 %v121
    %202 = vmatpush.msra.mxu0 %v120
    %203 = vmatpush.msra.mxu0 %v119
    %204 = vmatpush.msra.mxu0 %v118
    %205 = vmatpush.msra.mxu0 %v117
    %206 = vmatpush.msra.mxu0 %v116
    %207 = vmatpush.msra.mxu0 %v115
    %208 = vmatpush.msra.mxu0 %v114
    %209 = vmatpush.msra.mxu0 %v113
    %210 = vmatpush.msra.mxu0 %v112
    %211 = vmatpush.msra.mxu0 %v111
    %212 = vmatpush.msra.mxu0 %v110
    %213 = vmatpush.msra.mxu0 %v109
    %214 = vmatpush.msra.mxu0 %v108
    %215 = vmatpush.msra.mxu0 %v107
    %216 = vmatmul.f32.gmra.mxu0 %v198
    %v217 = vpop.f32.mrf.mxu0
    %v218 = vadd.f32 %v199, %v217
    %219 = vdwg.mxu0
    %220 = vst [vmem:[#allocation8] sm:$0xff] %v218
    // Predicated region
    $region26: #{tpu_custom_call.1} parent=1 // pred_check
      _
    $region27: #{tpu_custom_call.1} parent=1 // pred_check_branch
      %222 = sbr.rel (0) target = $region29
    $region28: #{tpu_custom_call.1} parent=1 // pred_region
      %224 = vsyncadd [#allocation4], 0
      %s226 = sshll.u32 [#allocation8], 4
      %s227 = int_to_ptr.vmem [resolvable:$true] %s226
      %s228 = sshll.u32 %s3, 4
      %s229 = int_to_ptr.hbm [resolvable:$true] %s228
      %231 = dma.vmem_to_hbm [thread:$0]  %s227, 128, %s229, [#allocation4]
    $region29: #{tpu_custom_call.1} parent=1 // pred_fallthru
      _
    // Predicated region
    $region30: #{tpu_custom_call.1} parent=1 // pred_check
      _
    $region31: #{tpu_custom_call.1} parent=1 // pred_check_branch
      %233 = sbr.rel (0) target = $region33
    $region32: #{tpu_custom_call.1} parent=1 // pred_region
      %235 = dma.done [#allocation4], 128
    $region33: #{tpu_custom_call.1} parent=1 // pred_fallthru
      _
    %236 = vsyncpa [#allocation3], 1
    %237 = vsyncpa [#allocation6], 1
    %238 = vsyncpa [#allocation4], 1

</llo_original>
